<compile_context>
chip_gen: v5e
topology: v5e:2x2
jax: 0.10.0
libtpu: 0.0.40
codegen_flags: <defaults>
</compile_context>

<pallas_src>
import math

import jax
import jax.numpy as jnp
import numpy as np
from jax.experimental import pallas as pl
from jax.experimental.pallas import tpu as pltpu


# ----------------------------------------------------------------------------
# Pallas kernel: fused (4x 1x1x1 conv) with attention scale folded into W
# ----------------------------------------------------------------------------
def _fused_conv_scale_kernel(w_ref, b_ref, x1_ref, x2_ref, x3_ref, x4_ref,
                             o_ref):
    # w_ref : (4, C, C)    per-batch attention-scaled conv weights (per modality)
    # b_ref : (C, 1)       per-batch combined bias  sum_i a[b,i,:]*bias_i  (f32)
    # x*_ref: (C, TILE_S)  channels-first modality tile (current batch / s-tile)
    # o_ref : (C, TILE_S)  fused output tile
    y = jnp.dot(w_ref[0], x1_ref[...], preferred_element_type=jnp.float32)
    y = y + jnp.dot(w_ref[1], x2_ref[...], preferred_element_type=jnp.float32)
    y = y + jnp.dot(w_ref[2], x3_ref[...], preferred_element_type=jnp.float32)
    y = y + jnp.dot(w_ref[3], x4_ref[...], preferred_element_type=jnp.float32)
    o_ref[...] = (y + b_ref[...]).astype(o_ref.dtype)


# ----------------------------------------------------------------------------
# Device-aware VMEM limit / spatial-tile sizing
# ----------------------------------------------------------------------------
def _physical_vmem_bytes():
    try:
        info = pltpu.get_tpu_info()
        for name in ("vmem_capacity_bytes", "vmem_bytes", "vmem_size_bytes"):
            v = getattr(info, name, None)
            if v:
                return int(v)
    except Exception:
        pass
    return 64 * 1024 * 1024          # conservative default (v7x per-TensorCore)


def _pick_vmem_limit_bytes():
    # ~75% of physical VMEM, capped at 96 MiB (v5e/v6e: 128 MiB; v7x: 64 MiB).
    return int(min(_physical_vmem_bytes() * 3 // 4, 96 * 1024 * 1024))


def _pick_tile_s(S, C, in_itemsize, out_itemsize, batch, vmem_limit_bytes,
                 *, min_grid_steps=16):
    """Largest lane-dense spatial tile whose double-buffered working set fits
    the VMEM budget, while keeping enough grid steps for pipelining / 2 TCs."""
    # double-buffered bytes per spatial element: 4 inputs + 1 output, 2 buffers
    per_elem = 2 * C * (4 * in_itemsize + out_itemsize)
    budget = int(vmem_limit_bytes * 0.45)          # headroom for weights/bias
    t_mem = max(128, (budget // per_elem) // 128 * 128)
    # keep batch * n_s >= min_grid_steps when possible
    want_ns = max(1, -(-min_grid_steps // max(int(batch), 1)))
    t_steps = -(-S // want_ns)                     # ceil(S / want_ns)
    t_steps = max(128, -(-t_steps // 128) * 128)   # round up to 128
    tile = int(min(t_mem, t_steps))
    return S if tile >= S else tile


# ----------------------------------------------------------------------------
# pallas_call wrapper
# ----------------------------------------------------------------------------
def fused_conv_scale(w4, b_comb, x1, x2, x3, x4, *, tile_s=None,
                     out_dtype=None, vmem_limit_bytes=None):
    """w4: [B,4,C,C]; b_comb: [B,C,1] (f32); x_i: [B,C,S] -> out [B,C,S]."""
    B, C, S = x1.shape
    in_dtype = x1.dtype
    out_dtype = in_dtype if out_dtype is None else out_dtype
    in_itemsize = np.dtype(in_dtype).itemsize
    out_itemsize = np.dtype(out_dtype).itemsize
    if vmem_limit_bytes is None:
        vmem_limit_bytes = _pick_vmem_limit_bytes()
    if tile_s is None:
        tile_s = _pick_tile_s(S, C, in_itemsize, out_itemsize, B,
                              vmem_limit_bytes)
    if tile_s >= S:
        tile_s = S
        n_s = 1
        S_pad = S
    else:
        if tile_s % 128 != 0:
            raise ValueError(f"tile_s={tile_s} must be a multiple of 128 "
                             f"(or >= S={S})")
        n_s = pl.cdiv(S, tile_s)
        S_pad = n_s * tile_s

    xs = (x1, x2, x3, x4)
    if S_pad != S:
        pad = ((0, 0), (0, 0), (0, S_pad - S))
        xs = tuple(jnp.pad(x, pad) for x in xs)

    x_spec = pl.BlockSpec((None, C, tile_s), lambda b, s: (b, 0, s))
    cost = pl.CostEstimate(
        flops=2 * B * S_pad * C * 4 * C,
        transcendentals=0,
        bytes_accessed=(4 * B * C * S_pad + B * 4 * C * C) * in_itemsize
                        + B * C * S_pad * out_itemsize
                        + B * C * 4,
    )
    out = pl.pallas_call(
        _fused_conv_scale_kernel,
        out_shape=jax.ShapeDtypeStruct((B, C, S_pad), out_dtype),
        grid=(B, n_s),
        in_specs=[
            # weight / bias blocks depend only on b -> DMA'd once per batch
            pl.BlockSpec((None, 4, C, C), lambda b, s: (b, 0, 0, 0)),
            pl.BlockSpec((None, C, 1), lambda b, s: (b, 0, 0)),
            x_spec, x_spec, x_spec, x_spec,
        ],
        out_specs=x_spec,
        compiler_params=pltpu.CompilerParams(
            dimension_semantics=("parallel", "parallel"),
            vmem_limit_bytes=int(vmem_limit_bytes)),
        cost_estimate=cost,
    )(w4, b_comb.astype(jnp.float32), *xs)
    if S_pad != S:
        out = out[:, :, :S]
    return out


# ----------------------------------------------------------------------------
# CCDPA (one cross-channel dot-product attention block)
# ----------------------------------------------------------------------------
def init_ccdpa_params(key, C, D):
    ks = jax.random.split(key, 6)
    s = 0.1
    return {
        "wq": jax.random.normal(ks[0], (D, D), jnp.float32) * s,   # Linear(D,D)
        "bq": jax.random.normal(ks[1], (D,), jnp.float32) * s,
        "wk": jax.random.normal(ks[2], (D, D), jnp.float32) * s,   # Linear(D,D)
        "bk": jax.random.normal(ks[3], (D,), jnp.float32) * s,
        # four 1x1x1 Conv3d(C, C): weight [c_out, c_in], bias [c_out]
        "conv_w": jax.random.normal(ks[4], (4, C, C), jnp.float32) * s,
        "conv_b": jax.random.normal(ks[5], (4, C), jnp.float32) * s,
        # `self.out` from the PyTorch module is unused in forward() -> omitted.
    }


def _ccdpa_attention(p, pooled_list, D):
    """pooled_list: 4 x [B,C,D] (f32) -> per-modality/channel scales a: [B,4,C]."""
    q = pooled_list[0] @ p["wq"].T + p["bq"]                   # [B,C,D]
    keys = jnp.stack(pooled_list, axis=2) @ p["wk"].T + p["bk"]  # [B,C,4,D]
    logits = jnp.einsum("bcd,bckd->bck", q, keys) / math.sqrt(D)
    a = jax.nn.softmax(logits, axis=-1)                        # [B,C,4]
    return jnp.transpose(a, (0, 2, 1))                         # [B,4,C]


def ccdpa_apply(p, ms, pooled_ms, *, tile_s=None, vmem_limit_bytes=None):
    """ms: 4 x [B,C,D,W,H] (already in compute dtype); pooled_ms: 4 x [B,C,D] f32.
    Returns (fused volume [B,C,D,W,H] in ms dtype, pooled fused output [B,C,D] f32)."""
    B, C, D, W, H = ms[0].shape
    S = D * W * H

    a = _ccdpa_attention(p, pooled_ms, D)                      # [B,4,C] f32
    # Fold per-(batch, modality, out-channel) attention scale into the conv
    # weights; pre-combine the four biases (small [B,4,C,C] / [B,C,1] tensors).
    w_scaled = a[:, :, :, None] * p["conv_w"][None]            # [B,4,Cout,Cin] f32
    b_comb = jnp.einsum("bic,ic->bc", a, p["conv_b"])[..., None]   # [B,C,1] f32

    # Pooled output computed analytically (the fused op is linear over W,H), so
    # the freshly written volume never needs to be re-read from HBM to pool it.
    pooled_stack = jnp.stack(pooled_ms, axis=1)                # [B,4,Cin,D]
    pooled_out = jnp.einsum("bioc,bicd->bod", w_scaled, pooled_stack) + b_comb

    # Channels-first flatten: NCDWH -> [B, C, S] is a free reshape.
    xs = [m.reshape(B, C, S) for m in ms]
    out = fused_conv_scale(w_scaled.astype(ms[0].dtype), b_comb, *xs,
                           tile_s=tile_s, out_dtype=ms[0].dtype,
                           vmem_limit_bytes=vmem_limit_bytes)
    return out.reshape(B, C, D, W, H), pooled_out


# ----------------------------------------------------------------------------
# CMSA
# ----------------------------------------------------------------------------
def init_cmsa_params(key, C, D):
    return [init_ccdpa_params(k, C, D) for k in jax.random.split(key, 4)]


_CMSA_ORDER = (
    ("t1",    ("t1", "t1ce", "t2", "flair")),
    ("t1ce",  ("t1ce", "t1", "t2", "flair")),
    ("t2",    ("t2", "t1", "t1ce", "flair")),
    ("flair", ("flair", "t1", "t1ce", "t2")),
)


def cmsa_apply(params, t1, t1ce, t2, flair, *, compute_dtype=jnp.float32,
               tile_s=None):
    vols = {"t1": t1, "t1ce": t1ce, "t2": t2, "flair": flair}
    # adaptive_avg_pool3d(m, (D,1,1)) == mean over (W,H). Computed ONCE per
    # modality (f32) and cached/updated across the four CCDPA blocks.
    pooled = {k: v.astype(jnp.float32).mean(axis=(3, 4)) for k, v in vols.items()}
    if np.dtype(compute_dtype) != np.dtype(vols["t1"].dtype):
        vols = {k: v.astype(compute_dtype) for k, v in vols.items()}  # one cast
    vmem_limit_bytes = _pick_vmem_limit_bytes()
    for p, (tgt, srcs) in zip(params, _CMSA_ORDER):
        ms = [vols[s] for s in srcs]
        pooled_ms = [pooled[s] for s in srcs]
        out, pooled_out = ccdpa_apply(p, ms, pooled_ms, tile_s=tile_s,
                                      vmem_limit_bytes=vmem_limit_bytes)
        vols[tgt] = out
        pooled[tgt] = pooled_out
    return vols["t1"], vols["t1ce"], vols["t2"], vols["flair"]


# ----------------------------------------------------------------------------
# Pure-JAX reference (mirrors the PyTorch forward exactly) for verification
# ----------------------------------------------------------------------------
def ccdpa_ref(p, m1, m2, m3, m4):
    ms = (m1, m2, m3, m4)
    D = m1.shape[2]
    pooled = [m.mean(axis=(3, 4)) for m in ms]
    q = pooled[0] @ p["wq"].T + p["bq"]
    keys = jnp.stack(pooled, axis=2) @ p["wk"].T + p["bk"]
    logits = jnp.einsum("bcd,bckd->bck", q, keys) / math.sqrt(D)
    a = jax.nn.softmax(logits, axis=-1)                        # [B,C,4]
    out = jnp.zeros_like(m1)
    for i in range(4):
        y = jnp.einsum("oc,bcdwh->bodwh", p["conv_w"][i], ms[i])
        y = y + p["conv_b"][i][None, :, None, None, None]
        out = out + a[:, :, i][:, :, None, None, None] * y
    return out


def cmsa_ref(params, t1, t1ce, t2, flair):
    t1 = ccdpa_ref(params[0], t1, t1ce, t2, flair)
    t1ce = ccdpa_ref(params[1], t1ce, t1, t2, flair)
    t2 = ccdpa_ref(params[2], t2, t1, t1ce, flair)
    flair = ccdpa_ref(params[3], flair, t1, t1ce, t2)
    return t1, t1ce, t2, flair


# ----------------------------------------------------------------------------
if __name__ == "__main__":
    # Small shapes consistent with the module ([B, C, D, W, H], img_dim = D).
    B, C, D, W, H = 2, 16, 8, 8, 8          # S = D*W*H = 512

    key = jax.random.PRNGKey(0)
    k1, k2, k3, k4 = jax.random.split(key, 4)
    t1 = jax.random.normal(k1, (B, C, D, W, H), jnp.float32)
    t1ce = jax.random.normal(k2, (B, C, D, W, H), jnp.float32)
    t2 = jax.random.normal(k3, (B, C, D, W, H), jnp.float32)
    flair = jax.random.normal(k4, (B, C, D, W, H), jnp.float32)

    params = init_cmsa_params(jax.random.PRNGKey(42), C, D)
    refs = cmsa_ref(params, t1, t1ce, t2, flair)

    cmsa_jit = jax.jit(cmsa_apply, static_argnames=("compute_dtype", "tile_s"))

    # 1) f32, auto spatial tile (grid (B, S//128) here -> pipelined multi-tile)
    outs = jax.block_until_ready(cmsa_jit(params, t1, t1ce, t2, flair))
    for o, r in zip(outs, refs):
        np.testing.assert_allclose(np.asarray(o), np.asarray(r),
                                   rtol=1e-4, atol=1e-4)

    # 2) f32, forced single full-S tile (exercises the tile_s == S path)
    outs_t = jax.block_until_ready(
        cmsa_jit(params, t1, t1ce, t2, flair, tile_s=512))
    for o, r in zip(outs_t, refs):
        np.testing.assert_allclose(np.asarray(o), np.asarray(r),
                                   rtol=1e-4, atol=1e-4)

    # 3) bf16 end-to-end (cast once at entry, bf16 block outputs), f32 accumulate
    outs_bf = jax.block_until_ready(
        cmsa_jit(params, t1, t1ce, t2, flair, compute_dtype=jnp.bfloat16))
    for o, r in zip(outs_bf, refs):
        np.testing.assert_allclose(np.asarray(o).astype(np.float32),
                                   np.asarray(r), rtol=1e-1, atol=1e-1)

    print("KERNEL_OK")
</pallas_src>

<mosaic_0001>
module attributes {stable_mosaic.version = 11 : i64} {
  func.func @_fused_conv_scale_kernel(%arg0: i32, %arg1: i32, %arg2: memref<1x4x16x16xf32, #tpu.memory_space<vmem>>, %arg3: memref<1x16x1xf32, #tpu.memory_space<vmem>>, %arg4: memref<1x16x128xf32, #tpu.memory_space<vmem>>, %arg5: memref<1x16x128xf32, #tpu.memory_space<vmem>>, %arg6: memref<1x16x128xf32, #tpu.memory_space<vmem>>, %arg7: memref<1x16x128xf32, #tpu.memory_space<vmem>>, %arg8: memref<1x16x128xf32, #tpu.memory_space<vmem>>) attributes {dimension_semantics = [#tpu.dimension_semantics<parallel>, #tpu.dimension_semantics<parallel>], iteration_bounds = array<i64: 2, 4>, scalar_prefetch = 0 : i64, scratch_operands = 0 : i64, tpu.core_type = #tpu.core_type<tc>, window_params = [{transform_indices = @transform_0, window_bounds = array<i64: 1, 4, 16, 16>}, {transform_indices = @transform_1, window_bounds = array<i64: 1, 16, 1>}, {transform_indices = @transform_2, window_bounds = array<i64: 1, 16, 128>}, {transform_indices = @transform_3, window_bounds = array<i64: 1, 16, 128>}, {transform_indices = @transform_4, window_bounds = array<i64: 1, 16, 128>}, {transform_indices = @transform_5, window_bounds = array<i64: 1, 16, 128>}, {transform_indices = @transform_6, window_bounds = array<i64: 1, 16, 128>}]} {
    %c0 = arith.constant 0 : index
    %c0_0 = arith.constant 0 : index
    %c0_1 = arith.constant 0 : index
    %c0_2 = arith.constant 0 : index
    %0 = vector.load %arg2[%c0, %c0_0, %c0_1, %c0_2] : memref<1x4x16x16xf32, #tpu.memory_space<vmem>>, vector<1x1x16x16xf32>
    %1 = vector.shape_cast %0 : vector<1x1x16x16xf32> to vector<16x16xf32>
    %c0_3 = arith.constant 0 : index
    %c0_4 = arith.constant 0 : index
    %c0_5 = arith.constant 0 : index
    %2 = vector.load %arg4[%c0_3, %c0_4, %c0_5] : memref<1x16x128xf32, #tpu.memory_space<vmem>>, vector<1x16x128xf32>
    %3 = vector.shape_cast %2 : vector<1x16x128xf32> to vector<16x128xf32>
    %cst = arith.constant dense<0.000000e+00> : vector<16x128xf32>
    %4 = tpu.matmul %1, %3, %cst {dimension_numbers = #tpu.dot_dimension_numbers<[1], [0], [0], [1], [0, 0, 1, 1], [], []>} : vector<16x16xf32>, vector<16x128xf32>, vector<16x128xf32> -> vector<16x128xf32>
    %c0_6 = arith.constant 0 : index
    %c1 = arith.constant 1 : index
    %c0_7 = arith.constant 0 : index
    %c0_8 = arith.constant 0 : index
    %5 = vector.load %arg2[%c0_6, %c1, %c0_7, %c0_8] : memref<1x4x16x16xf32, #tpu.memory_space<vmem>>, vector<1x1x16x16xf32>
    %6 = vector.shape_cast %5 : vector<1x1x16x16xf32> to vector<16x16xf32>
    %c0_9 = arith.constant 0 : index
    %c0_10 = arith.constant 0 : index
    %c0_11 = arith.constant 0 : index
    %7 = vector.load %arg5[%c0_9, %c0_10, %c0_11] : memref<1x16x128xf32, #tpu.memory_space<vmem>>, vector<1x16x128xf32>
    %8 = vector.shape_cast %7 : vector<1x16x128xf32> to vector<16x128xf32>
    %cst_12 = arith.constant dense<0.000000e+00> : vector<16x128xf32>
    %9 = tpu.matmul %6, %8, %cst_12 {dimension_numbers = #tpu.dot_dimension_numbers<[1], [0], [0], [1], [0, 0, 1, 1], [], []>} : vector<16x16xf32>, vector<16x128xf32>, vector<16x128xf32> -> vector<16x128xf32>
    %10 = arith.addf %4, %9 : vector<16x128xf32>
    %c0_13 = arith.constant 0 : index
    %c2 = arith.constant 2 : index
    %c0_14 = arith.constant 0 : index
    %c0_15 = arith.constant 0 : index
    %11 = vector.load %arg2[%c0_13, %c2, %c0_14, %c0_15] : memref<1x4x16x16xf32, #tpu.memory_space<vmem>>, vector<1x1x16x16xf32>
    %12 = vector.shape_cast %11 : vector<1x1x16x16xf32> to vector<16x16xf32>
    %c0_16 = arith.constant 0 : index
    %c0_17 = arith.constant 0 : index
    %c0_18 = arith.constant 0 : index
    %13 = vector.load %arg6[%c0_16, %c0_17, %c0_18] : memref<1x16x128xf32, #tpu.memory_space<vmem>>, vector<1x16x128xf32>
    %14 = vector.shape_cast %13 : vector<1x16x128xf32> to vector<16x128xf32>
    %cst_19 = arith.constant dense<0.000000e+00> : vector<16x128xf32>
    %15 = tpu.matmul %12, %14, %cst_19 {dimension_numbers = #tpu.dot_dimension_numbers<[1], [0], [0], [1], [0, 0, 1, 1], [], []>} : vector<16x16xf32>, vector<16x128xf32>, vector<16x128xf32> -> vector<16x128xf32>
    %16 = arith.addf %10, %15 : vector<16x128xf32>
    %c0_20 = arith.constant 0 : index
    %c3 = arith.constant 3 : index
    %c0_21 = arith.constant 0 : index
    %c0_22 = arith.constant 0 : index
    %17 = vector.load %arg2[%c0_20, %c3, %c0_21, %c0_22] : memref<1x4x16x16xf32, #tpu.memory_space<vmem>>, vector<1x1x16x16xf32>
    %18 = vector.shape_cast %17 : vector<1x1x16x16xf32> to vector<16x16xf32>
    %c0_23 = arith.constant 0 : index
    %c0_24 = arith.constant 0 : index
    %c0_25 = arith.constant 0 : index
    %19 = vector.load %arg7[%c0_23, %c0_24, %c0_25] : memref<1x16x128xf32, #tpu.memory_space<vmem>>, vector<1x16x128xf32>
    %20 = vector.shape_cast %19 : vector<1x16x128xf32> to vector<16x128xf32>
    %cst_26 = arith.constant dense<0.000000e+00> : vector<16x128xf32>
    %21 = tpu.matmul %18, %20, %cst_26 {dimension_numbers = #tpu.dot_dimension_numbers<[1], [0], [0], [1], [0, 0, 1, 1], [], []>} : vector<16x16xf32>, vector<16x128xf32>, vector<16x128xf32> -> vector<16x128xf32>
    %22 = arith.addf %16, %21 : vector<16x128xf32>
    %c0_27 = arith.constant 0 : index
    %c0_28 = arith.constant 0 : index
    %c0_29 = arith.constant 0 : index
    %23 = vector.load %arg3[%c0_27, %c0_28, %c0_29] : memref<1x16x1xf32, #tpu.memory_space<vmem>>, vector<1x16x1xf32>
    %24 = vector.shape_cast %23 : vector<1x16x1xf32> to vector<16x1xf32>
    %25 = vector.broadcast %24 : vector<16x1xf32> to vector<16x128xf32>
    %26 = arith.addf %22, %25 : vector<16x128xf32>
    %c0_30 = arith.constant 0 : index
    %c0_31 = arith.constant 0 : index
    %c0_32 = arith.constant 0 : index
    %27 = vector.load %arg8[%c0_30, %c0_31, %c0_32] : memref<1x16x128xf32, #tpu.memory_space<vmem>>, vector<1x16x128xf32>
    %28 = vector.shape_cast %27 : vector<1x16x128xf32> to vector<16x128xf32>
    %29 = vector.shape_cast %26 : vector<16x128xf32> to vector<1x16x128xf32>
    tpu.vector_store %arg8[%c0_30, %c0_31, %c0_32], %29 {strides = array<i32>} : memref<1x16x128xf32, #tpu.memory_space<vmem>>, vector<1x16x128xf32>,
    return
  }
  func.func @transform_0(%arg0: i32, %arg1: i32) -> (i32, i32, i32, i32) {
    %c0_i32 = arith.constant 0 : i32
    %c0_i32_0 = arith.constant 0 : i32
    %c0_i32_1 = arith.constant 0 : i32
    %c0_i32_2 = arith.constant 0 : i32
    return %arg0, %c0_i32, %c0_i32_0, %c0_i32_1 : i32, i32, i32, i32
  }
  func.func @transform_1(%arg0: i32, %arg1: i32) -> (i32, i32, i32) {
    %c0_i32 = arith.constant 0 : i32
    %c0_i32_0 = arith.constant 0 : i32
    %c0_i32_1 = arith.constant 0 : i32
    return %arg0, %c0_i32, %c0_i32_0 : i32, i32, i32
  }
  func.func @transform_2(%arg0: i32, %arg1: i32) -> (i32, i32, i32) {
    %c0_i32 = arith.constant 0 : i32
    %c0_i32_0 = arith.constant 0 : i32
    return %arg0, %c0_i32, %arg1 : i32, i32, i32
  }
  func.func @transform_3(%arg0: i32, %arg1: i32) -> (i32, i32, i32) {
    %c0_i32 = arith.constant 0 : i32
    %c0_i32_0 = arith.constant 0 : i32
    return %arg0, %c0_i32, %arg1 : i32, i32, i32
  }
  func.func @transform_4(%arg0: i32, %arg1: i32) -> (i32, i32, i32) {
    %c0_i32 = arith.constant 0 : i32
    %c0_i32_0 = arith.constant 0 : i32
    return %arg0, %c0_i32, %arg1 : i32, i32, i32
  }
  func.func @transform_5(%arg0: i32, %arg1: i32) -> (i32, i32, i32) {
    %c0_i32 = arith.constant 0 : i32
    %c0_i32_0 = arith.constant 0 : i32
    return %arg0, %c0_i32, %arg1 : i32, i32, i32
  }
  func.func @transform_6(%arg0: i32, %arg1: i32) -> (i32, i32, i32) {
    %c0_i32 = arith.constant 0 : i32
    %c0_i32_0 = arith.constant 0 : i32
    return %arg0, %c0_i32, %arg1 : i32, i32, i32
  }
}

</mosaic_0001>

<llo_original>
// kernel: cmsa_apply.4
$region0: #{cmsa_apply.4}
  #allocation0 [shape = 'u32[]', space=smem, size = 0x4, offset = 0x4, fixed_abs, tag = 'smem constant byte address 0x4 - core index']
  #allocation1 [shape = 'u32[72,128]{1,0:T(1,128)}', space=vmem, size = 0x9000, scoped, tag = 'internal scratch']
  %s0 = inlined_call_operand.vmem [shape: f32[2,4,16,16], index: 0, kind: input, shape index: {}]
  %s1 = inlined_call_operand.vmem [shape: f32[2,16,1], index: 1, kind: input, shape index: {}]
  %s2 = inlined_call_operand.vmem [shape: f32[2,16,512], index: 2, kind: input, shape index: {}]
  %s3 = inlined_call_operand.vmem [shape: f32[2,16,512], index: 3, kind: input, shape index: {}]
  %s4 = inlined_call_operand.vmem [shape: f32[2,16,512], index: 4, kind: input, shape index: {}]
  %s5 = inlined_call_operand.vmem [shape: f32[2,16,512], index: 5, kind: input, shape index: {}]
  %s6 = inlined_call_operand.vmem [shape: f32[2,16,512], index: 6, kind: output, shape index: {}]
  %s7 = sld [smem:[#allocation0]]
  $region243: #{cmsa_apply.4} parent=0
    _
  %s9 = ssub.s32 1, %s7
  %s10 = scalar_select 0, %s9, %s7
  $region1: #{cmsa_apply.4} parent=0
    #allocation2 [shape = 'u8[16384]{0}', space=vmem, size = 0x4000, scoped, tag = 'input window, operand 2']
    #allocation3 [shape = 'u8[16384]{0}', space=vmem, size = 0x4000, scoped, tag = 'input window, operand 3']
    #allocation4 [shape = 'u8[16384]{0}', space=vmem, size = 0x4000, scoped, tag = 'input window, operand 4']
    #allocation5 [shape = 'u8[16384]{0}', space=vmem, size = 0x4000, scoped, tag = 'input window, operand 5']
    #allocation6 [shape = 'u8[16384]{0}', space=vmem, size = 0x4000, scoped, tag = 'output window, operand 0']
    loop: start=0, step=1, limit=10
    $region2: #{cmsa_apply.4} parent=1 // loop_pre_header
      _
    $region3: #{cmsa_apply.4} parent=1 // loop_header
      %s12 = sphi 0, %s16
      %p13 = scmp.ge.s32.totalorder %s12, 10
      %s19 = sphi 0, %s31
      %s20 = sphi 0, %s27
      %s21 = sphi 0, %s19
      %s22 = sphi 0, %s20
      %s23 = sphi 0, %s21
      %s24 = sphi 0, %s22
      %s34 = sphi 0, %s36
      %s37 = sphi 0, %s34
      %s38 = sphi 0, %s37
      %s54 = sphi 0, %s38
      %s60 = sphi 0, %s62
      %s63 = sphi 0, %s60
      %s64 = sphi 0, %s63
      %s80 = sphi 0, %s64
      %s88 = sphi 0, %s90
      %s91 = sphi 0, %s88
      %s92 = sphi 0, %s91
      %s108 = sphi 0, %s92
      %s116 = sphi 0, %s118
      %s119 = sphi 0, %s116
      %s120 = sphi 0, %s119
      %s136 = sphi 0, %s120
      %s144 = sphi 0, %s146
      %s147 = sphi 0, %s144
      %s148 = sphi 0, %s147
      %s164 = sphi 0, %s148
      %s172 = sphi 0, %s174
      %s175 = sphi 0, %s172
      %s176 = sphi 0, %s175
      %s192 = sphi 0, %s176
      %s200 = sphi 0, %s202
      %s203 = sphi 0, %s200
      %s204 = sphi 0, %s203
      %s220 = sphi 0, %s204
    $region4: #{cmsa_apply.4} parent=1 // loop_header_branch
      %15 = sbr.rel (%p13) target = $region8
    $region5: #{cmsa_apply.4} parent=1 // loop_body
      %s17 = ssub.s32 %s12, 1
      %s18 = ssub.s32 %s12, 2
      %s25 = sadd.s32 1, %s20
      %p26 = scmp.ge.s32.totalorder %s25, 4
      %s27 = scalar_select %p26, 0, %s25
      %s28 = sadd.s32 1, %s19
      %s29 = scalar_select %p26, %s28, %s19
      %p30 = scmp.ge.s32.totalorder %s29, 2
      %s31 = scalar_select %p30, 0, %s29
      %s32 = ssub.s32 %s19, %s31
      %p33 = scmp.eq.s32.totalorder %s32, 0
      %s35 = sadd.s32 %s34, 1
      %s36 = scalar_select %p33, %s34, %s35
      %p39 = pneg %p33
      %p40 = scmp.eq.s32.totalorder %s12, 7
      %p41 = por %p39, %p40
      %p42 = scmp.ne.s32.totalorder %s34, %s37
      %p43 = scmp.eq.s32.totalorder %s12, 0
      %p44 = por %p42, %p43
      %p45 = scmp.ne.s32.totalorder %s34, %s37
      %p46 = scmp.eq.s32.totalorder %s17, 7
      %p47 = por %p45, %p46
      %p48 = scmp.ne.s32.totalorder %s37, %s38
      %p49 = scmp.eq.s32.totalorder %s17, 0
      %p50 = por %p48, %p49
      %p51 = scmp.ne.s32.totalorder %s37, %s38
      %p52 = scmp.eq.s32.totalorder %s18, 7
      %p53 = por %p51, %p52
      %p55 = scmp.ne.s32.totalorder %s38, %s54
      %p56 = scmp.eq.s32.totalorder %s18, 0
      %p57 = por %p55, %p56
      %s58 = ssub.s32 %s19, %s31
      %p59 = scmp.eq.s32.totalorder %s58, 0
      %s61 = sadd.s32 %s60, 1
      %s62 = scalar_select %p59, %s60, %s61
      %p65 = pneg %p59
      %p66 = scmp.eq.s32.totalorder %s12, 7
      %p67 = por %p65, %p66
      %p68 = scmp.ne.s32.totalorder %s60, %s63
      %p69 = scmp.eq.s32.totalorder %s12, 0
      %p70 = por %p68, %p69
      %p71 = scmp.ne.s32.totalorder %s60, %s63
      %p72 = scmp.eq.s32.totalorder %s17, 7
      %p73 = por %p71, %p72
      %p74 = scmp.ne.s32.totalorder %s63, %s64
      %p75 = scmp.eq.s32.totalorder %s17, 0
      %p76 = por %p74, %p75
      %p77 = scmp.ne.s32.totalorder %s63, %s64
      %p78 = scmp.eq.s32.totalorder %s18, 7
      %p79 = por %p77, %p78
      %p81 = scmp.ne.s32.totalorder %s64, %s80
      %p82 = scmp.eq.s32.totalorder %s18, 0
      %p83 = por %p81, %p82
      %s84 = ssub.s32 %s19, %s31
      %s85 = ssub.s32 %s20, %s27
      %s86 = sor.u32 %s84, %s85
      %p87 = scmp.eq.s32.totalorder %s86, 0
      %s89 = sadd.s32 %s88, 1
      %s90 = scalar_select %p87, %s88, %s89
      %p93 = pneg %p87
      %p94 = scmp.eq.s32.totalorder %s12, 7
      %p95 = por %p93, %p94
      %p96 = scmp.ne.s32.totalorder %s88, %s91
      %p97 = scmp.eq.s32.totalorder %s12, 0
      %p98 = por %p96, %p97
      %p99 = scmp.ne.s32.totalorder %s88, %s91
      %p100 = scmp.eq.s32.totalorder %s17, 7
      %p101 = por %p99, %p100
      %p102 = scmp.ne.s32.totalorder %s91, %s92
      %p103 = scmp.eq.s32.totalorder %s17, 0
      %p104 = por %p102, %p103
      %p105 = scmp.ne.s32.totalorder %s91, %s92
      %p106 = scmp.eq.s32.totalorder %s18, 7
      %p107 = por %p105, %p106
      %p109 = scmp.ne.s32.totalorder %s92, %s108
      %p110 = scmp.eq.s32.totalorder %s18, 0
      %p111 = por %p109, %p110
      %s112 = ssub.s32 %s19, %s31
      %s113 = ssub.s32 %s20, %s27
      %s114 = sor.u32 %s112, %s113
      %p115 = scmp.eq.s32.totalorder %s114, 0
      %s117 = sadd.s32 %s116, 1
      %s118 = scalar_select %p115, %s116, %s117
      %p121 = pneg %p115
      %p122 = scmp.eq.s32.totalorder %s12, 7
      %p123 = por %p121, %p122
      %p124 = scmp.ne.s32.totalorder %s116, %s119
      %p125 = scmp.eq.s32.totalorder %s12, 0
      %p126 = por %p124, %p125
      %p127 = scmp.ne.s32.totalorder %s116, %s119
      %p128 = scmp.eq.s32.totalorder %s17, 7
      %p129 = por %p127, %p128
      %p130 = scmp.ne.s32.totalorder %s119, %s120
      %p131 = scmp.eq.s32.totalorder %s17, 0
      %p132 = por %p130, %p131
      %p133 = scmp.ne.s32.totalorder %s119, %s120
      %p134 = scmp.eq.s32.totalorder %s18, 7
      %p135 = por %p133, %p134
      %p137 = scmp.ne.s32.totalorder %s120, %s136
      %p138 = scmp.eq.s32.totalorder %s18, 0
      %p139 = por %p137, %p138
      %s140 = ssub.s32 %s19, %s31
      %s141 = ssub.s32 %s20, %s27
      %s142 = sor.u32 %s140, %s141
      %p143 = scmp.eq.s32.totalorder %s142, 0
      %s145 = sadd.s32 %s144, 1
      %s146 = scalar_select %p143, %s144, %s145
      %p149 = pneg %p143
      %p150 = scmp.eq.s32.totalorder %s12, 7
      %p151 = por %p149, %p150
      %p152 = scmp.ne.s32.totalorder %s144, %s147
      %p153 = scmp.eq.s32.totalorder %s12, 0
      %p154 = por %p152, %p153
      %p155 = scmp.ne.s32.totalorder %s144, %s147
      %p156 = scmp.eq.s32.totalorder %s17, 7
      %p157 = por %p155, %p156
      %p158 = scmp.ne.s32.totalorder %s147, %s148
      %p159 = scmp.eq.s32.totalorder %s17, 0
      %p160 = por %p158, %p159
      %p161 = scmp.ne.s32.totalorder %s147, %s148
      %p162 = scmp.eq.s32.totalorder %s18, 7
      %p163 = por %p161, %p162
      %p165 = scmp.ne.s32.totalorder %s148, %s164
      %p166 = scmp.eq.s32.totalorder %s18, 0
      %p167 = por %p165, %p166
      %s168 = ssub.s32 %s19, %s31
      %s169 = ssub.s32 %s20, %s27
      %s170 = sor.u32 %s168, %s169
      %p171 = scmp.eq.s32.totalorder %s170, 0
      %s173 = sadd.s32 %s172, 1
      %s174 = scalar_select %p171, %s172, %s173
      %p177 = pneg %p171
      %p178 = scmp.eq.s32.totalorder %s12, 7
      %p179 = por %p177, %p178
      %p180 = scmp.ne.s32.totalorder %s172, %s175
      %p181 = scmp.eq.s32.totalorder %s12, 0
      %p182 = por %p180, %p181
      %p183 = scmp.ne.s32.totalorder %s172, %s175
      %p184 = scmp.eq.s32.totalorder %s17, 7
      %p185 = por %p183, %p184
      %p186 = scmp.ne.s32.totalorder %s175, %s176
      %p187 = scmp.eq.s32.totalorder %s17, 0
      %p188 = por %p186, %p187
      %p189 = scmp.ne.s32.totalorder %s175, %s176
      %p190 = scmp.eq.s32.totalorder %s18, 7
      %p191 = por %p189, %p190
      %p193 = scmp.ne.s32.totalorder %s176, %s192
      %p194 = scmp.eq.s32.totalorder %s18, 0
      %p195 = por %p193, %p194
      %s196 = ssub.s32 %s19, %s31
      %s197 = ssub.s32 %s20, %s27
      %s198 = sor.u32 %s196, %s197
      %p199 = scmp.eq.s32.totalorder %s198, 0
      %s201 = sadd.s32 %s200, 1
      %s202 = scalar_select %p199, %s200, %s201
      %p205 = pneg %p199
      %p206 = scmp.eq.s32.totalorder %s12, 7
      %p207 = por %p205, %p206
      %p208 = scmp.ne.s32.totalorder %s200, %s203
      %p209 = scmp.eq.s32.totalorder %s12, 0
      %p210 = por %p208, %p209
      %p211 = scmp.ne.s32.totalorder %s200, %s203
      %p212 = scmp.eq.s32.totalorder %s17, 7
      %p213 = por %p211, %p212
      %p214 = scmp.ne.s32.totalorder %s203, %s204
      %p215 = scmp.eq.s32.totalorder %s17, 0
      %p216 = por %p214, %p215
      %p217 = scmp.ne.s32.totalorder %s203, %s204
      %p218 = scmp.eq.s32.totalorder %s18, 7
      %p219 = por %p217, %p218
      %p221 = scmp.ne.s32.totalorder %s204, %s220
      %p222 = scmp.eq.s32.totalorder %s18, 0
      %p223 = por %p221, %p222
      %p224 = scmp.le.s32.totalorder 1, %s12
      %p225 = scmp.lt.s32.totalorder %s12, 9
      %p226 = pnand %p224, %p225
      %p227 = pneg %p226
      // Predicated region
      $region9: #{cmsa_apply.4} parent=5 // pred_check
        _
      $region10: #{cmsa_apply.4} parent=5 // pred_check_branch
        %229 = sbr.rel (%p226) target = $region12
      $region11: #{cmsa_apply.4} parent=5 // pred_region
        %s230 = ssub.s32 %s12, 1
      $region12: #{cmsa_apply.4} parent=5 // pred_fallthru
        _
      %p231 = scmp.lt.s32.totalorder %s12, 8
      // Predicated region
      $region13: #{cmsa_apply.4} parent=5 // pred_check
        %p232 = pneg %p231
      $region14: #{cmsa_apply.4} parent=5 // pred_check_branch
        %234 = sbr.rel (%p232) target = $region16
      $region15: #{cmsa_apply.4} parent=5 // pred_region
        // Predicated region
        $region17: #{cmsa_apply.4} parent=15 // pred_check
          %p235 = pneg %p44
        $region18: #{cmsa_apply.4} parent=15 // pred_check_branch
          %237 = sbr.rel (%p235) target = $region20
        $region19: #{cmsa_apply.4} parent=15 // pred_region
          %p238 = scmp.lt.s32.totalorder %s19, 1
          %s239 = scalar_select %p238, %s19, 1
          %s240 = smul.addr %s239, 8
          %s241 = smul.addr %s240, 8
          %s242 = scalar_lea.vmem %s0, %s241
        $region20: #{cmsa_apply.4} parent=15 // pred_fallthru
          _
        // Predicated region
        $region21: #{cmsa_apply.4} parent=15 // pred_check
          %p243 = pneg %p70
        $region22: #{cmsa_apply.4} parent=15 // pred_check_branch
          %245 = sbr.rel (%p243) target = $region24
        $region23: #{cmsa_apply.4} parent=15 // pred_region
          %p246 = scmp.lt.s32.totalorder %s19, 1
          %s247 = scalar_select %p246, %s19, 1
          %s248 = smul.addr %s247, 2
          %s249 = smul.addr %s248, 8
          %s250 = scalar_lea.vmem %s1, %s249
        $region24: #{cmsa_apply.4} parent=15 // pred_fallthru
          _
        // Predicated region
        $region25: #{cmsa_apply.4} parent=15 // pred_check
          %p251 = pneg %p98
        $region26: #{cmsa_apply.4} parent=15 // pred_check_branch
          %253 = sbr.rel (%p251) target = $region28
        $region27: #{cmsa_apply.4} parent=15 // pred_region
          %s254 = sand.u32 %s88, 1
          %s255 = sand.u32 %s88, 1
          %s256 = smul.addr %s255, 16
          %s257 = scalar_lea.vmem [#allocation2], %s256
          %s258 = smul.addr %s19, 8
          %s259 = sadd.s32 %s20, %s258
          %s260 = smul.addr %s259, 8
          %s261 = scalar_lea.vmem %s2, %s260
          // Predicated region
          $region29: #{cmsa_apply.4} parent=27 // pred_check
            _
          $region30: #{cmsa_apply.4} parent=27 // pred_check_branch
            %263 = sbr.rel (0) target = $region32
          $region31: #{cmsa_apply.4} parent=27 // pred_region
            // Predicated region
            $region33: #{cmsa_apply.4} parent=31 // pred_check
              _
            $region34: #{cmsa_apply.4} parent=31 // pred_check_branch
              %265 = sbr.rel (0) target = $region36
            $region35: #{cmsa_apply.4} parent=31 // pred_region
              // Predicated region
              $region48: #{cmsa_apply.4} parent=35 // pred_check
                _
              $region49: #{cmsa_apply.4} parent=35 // pred_check_branch
                %283 = sbr.rel (0) target = $region51
              $region50: #{cmsa_apply.4} parent=35 // pred_region
                loop: start=0, step=1, limit=1
                $region52: #{cmsa_apply.4} parent=50 // loop_pre_header
                  _
                $region53: #{cmsa_apply.4} parent=50 // loop_header
                  %s285 = sphi 0, %s289
                  %p286 = scmp.ge.s32.totalorder %s285, 1
                  %s290 = sphi %s261, %s261
                  %s291 = sphi %s257, %s257
                $region54: #{cmsa_apply.4} parent=50 // loop_header_branch
                  %288 = sbr.rel (%p286) target = $region58
                $region55: #{cmsa_apply.4} parent=50 // loop_body
                  %v292 = vld [vmem:[%s290] sm:$0xff]
                  %293 = vst [vmem:[%s291] sm:$0xff] %v292
                  %v294 = vld [vmem:[%s290 + $0x20] sm:$0xff]
                  %295 = vst [vmem:[%s291 + $0x8] sm:$0xff] %v294
                $region56: #{cmsa_apply.4} parent=50 // loop_footer
                  %s289 = sadd.s32 1, %s285
                $region57: #{cmsa_apply.4} parent=50 // loop_footer_branch
                  %284 = sbr.rel target = $region53
                $region58: #{cmsa_apply.4} parent=50 // loop_exit
                  _
              $region51: #{cmsa_apply.4} parent=35 // pred_fallthru
                _
              // Predicated region
              $region59: #{cmsa_apply.4} parent=35 // pred_check
                _
              $region60: #{cmsa_apply.4} parent=35 // pred_check_branch
                %297 = sbr.rel target = $region62
              $region61: #{cmsa_apply.4} parent=35 // pred_region
                _
              $region62: #{cmsa_apply.4} parent=35 // pred_fallthru
                _
            $region36: #{cmsa_apply.4} parent=31 // pred_fallthru
              _
            // Predicated region
            $region37: #{cmsa_apply.4} parent=31 // pred_check
              _
            $region38: #{cmsa_apply.4} parent=31 // pred_check_branch
              %267 = sbr.rel target = $region40
            $region39: #{cmsa_apply.4} parent=31 // pred_region
              %s269 = ssub.s32 256, 1
              loop: start=0, step=1, limit=1
              $region41: #{cmsa_apply.4} parent=39 // loop_pre_header
                _
              $region42: #{cmsa_apply.4} parent=39 // loop_header
                %s271 = sphi 0, %s275
                %p272 = scmp.ge.s32.totalorder %s271, 1
                %s276 = sphi %s261, %s261
                %s277 = sphi %s257, %s257
              $region43: #{cmsa_apply.4} parent=39 // loop_header_branch
                %274 = sbr.rel (%p272) target = $region47
              $region44: #{cmsa_apply.4} parent=39 // loop_body
                %v278 = vld [vmem:[%s276] sm:%s269]
                %279 = vst [vmem:[%s277] sm:%s269] %v278
                %v280 = vld [vmem:[%s276 + $0x20] sm:%s269]
                %281 = vst [vmem:[%s277 + $0x8] sm:%s269] %v280
              $region45: #{cmsa_apply.4} parent=39 // loop_footer
                %s275 = sadd.s32 1, %s271
              $region46: #{cmsa_apply.4} parent=39 // loop_footer_branch
                %270 = sbr.rel target = $region42
              $region47: #{cmsa_apply.4} parent=39 // loop_exit
                _
            $region40: #{cmsa_apply.4} parent=31 // pred_fallthru
              _
          $region32: #{cmsa_apply.4} parent=27 // pred_fallthru
            _
          %298 = vnop
        $region28: #{cmsa_apply.4} parent=15 // pred_fallthru
          _
        // Predicated region
        $region63: #{cmsa_apply.4} parent=15 // pred_check
          %p299 = pneg %p126
        $region64: #{cmsa_apply.4} parent=15 // pred_check_branch
          %301 = sbr.rel (%p299) target = $region66
        $region65: #{cmsa_apply.4} parent=15 // pred_region
          %s302 = sand.u32 %s116, 1
          %s303 = sand.u32 %s116, 1
          %s304 = smul.addr %s303, 16
          %s305 = scalar_lea.vmem [#allocation3], %s304
          %s306 = smul.addr %s19, 8
          %s307 = sadd.s32 %s20, %s306
          %s308 = smul.addr %s307, 8
          %s309 = scalar_lea.vmem %s3, %s308
          // Predicated region
          $region67: #{cmsa_apply.4} parent=65 // pred_check
            _
          $region68: #{cmsa_apply.4} parent=65 // pred_check_branch
            %311 = sbr.rel (0) target = $region70
          $region69: #{cmsa_apply.4} parent=65 // pred_region
            // Predicated region
            $region71: #{cmsa_apply.4} parent=69 // pred_check
              _
            $region72: #{cmsa_apply.4} parent=69 // pred_check_branch
              %313 = sbr.rel (0) target = $region74
            $region73: #{cmsa_apply.4} parent=69 // pred_region
              // Predicated region
              $region86: #{cmsa_apply.4} parent=73 // pred_check
                _
              $region87: #{cmsa_apply.4} parent=73 // pred_check_branch
                %331 = sbr.rel (0) target = $region89
              $region88: #{cmsa_apply.4} parent=73 // pred_region
                loop: start=0, step=1, limit=1
                $region90: #{cmsa_apply.4} parent=88 // loop_pre_header
                  _
                $region91: #{cmsa_apply.4} parent=88 // loop_header
                  %s333 = sphi 0, %s337
                  %p334 = scmp.ge.s32.totalorder %s333, 1
                  %s338 = sphi %s309, %s309
                  %s339 = sphi %s305, %s305
                $region92: #{cmsa_apply.4} parent=88 // loop_header_branch
                  %336 = sbr.rel (%p334) target = $region96
                $region93: #{cmsa_apply.4} parent=88 // loop_body
                  %v340 = vld [vmem:[%s338] sm:$0xff]
                  %341 = vst [vmem:[%s339] sm:$0xff] %v340
                  %v342 = vld [vmem:[%s338 + $0x20] sm:$0xff]
                  %343 = vst [vmem:[%s339 + $0x8] sm:$0xff] %v342
                $region94: #{cmsa_apply.4} parent=88 // loop_footer
                  %s337 = sadd.s32 1, %s333
                $region95: #{cmsa_apply.4} parent=88 // loop_footer_branch
                  %332 = sbr.rel target = $region91
                $region96: #{cmsa_apply.4} parent=88 // loop_exit
                  _
              $region89: #{cmsa_apply.4} parent=73 // pred_fallthru
                _
              // Predicated region
              $region97: #{cmsa_apply.4} parent=73 // pred_check
                _
              $region98: #{cmsa_apply.4} parent=73 // pred_check_branch
                %345 = sbr.rel target = $region100
              $region99: #{cmsa_apply.4} parent=73 // pred_region
                _
              $region100: #{cmsa_apply.4} parent=73 // pred_fallthru
                _
            $region74: #{cmsa_apply.4} parent=69 // pred_fallthru
              _
            // Predicated region
            $region75: #{cmsa_apply.4} parent=69 // pred_check
              _
            $region76: #{cmsa_apply.4} parent=69 // pred_check_branch
              %315 = sbr.rel target = $region78
            $region77: #{cmsa_apply.4} parent=69 // pred_region
              %s317 = ssub.s32 256, 1
              loop: start=0, step=1, limit=1
              $region79: #{cmsa_apply.4} parent=77 // loop_pre_header
                _
              $region80: #{cmsa_apply.4} parent=77 // loop_header
                %s319 = sphi 0, %s323
                %p320 = scmp.ge.s32.totalorder %s319, 1
                %s324 = sphi %s309, %s309
                %s325 = sphi %s305, %s305
              $region81: #{cmsa_apply.4} parent=77 // loop_header_branch
                %322 = sbr.rel (%p320) target = $region85
              $region82: #{cmsa_apply.4} parent=77 // loop_body
                %v326 = vld [vmem:[%s324] sm:%s317]
                %327 = vst [vmem:[%s325] sm:%s317] %v326
                %v328 = vld [vmem:[%s324 + $0x20] sm:%s317]
                %329 = vst [vmem:[%s325 + $0x8] sm:%s317] %v328
              $region83: #{cmsa_apply.4} parent=77 // loop_footer
                %s323 = sadd.s32 1, %s319
              $region84: #{cmsa_apply.4} parent=77 // loop_footer_branch
                %318 = sbr.rel target = $region80
              $region85: #{cmsa_apply.4} parent=77 // loop_exit
                _
            $region78: #{cmsa_apply.4} parent=69 // pred_fallthru
              _
          $region70: #{cmsa_apply.4} parent=65 // pred_fallthru
            _
          %346 = vnop
        $region66: #{cmsa_apply.4} parent=15 // pred_fallthru
          _
        // Predicated region
        $region101: #{cmsa_apply.4} parent=15 // pred_check
          %p347 = pneg %p154
        $region102: #{cmsa_apply.4} parent=15 // pred_check_branch
          %349 = sbr.rel (%p347) target = $region104
        $region103: #{cmsa_apply.4} parent=15 // pred_region
          %s350 = sand.u32 %s144, 1
          %s351 = sand.u32 %s144, 1
          %s352 = smul.addr %s351, 16
          %s353 = scalar_lea.vmem [#allocation4], %s352
          %s354 = smul.addr %s19, 8
          %s355 = sadd.s32 %s20, %s354
          %s356 = smul.addr %s355, 8
          %s357 = scalar_lea.vmem %s4, %s356
          // Predicated region
          $region105: #{cmsa_apply.4} parent=103 // pred_check
            _
          $region106: #{cmsa_apply.4} parent=103 // pred_check_branch
            %359 = sbr.rel (0) target = $region108
          $region107: #{cmsa_apply.4} parent=103 // pred_region
            // Predicated region
            $region109: #{cmsa_apply.4} parent=107 // pred_check
              _
            $region110: #{cmsa_apply.4} parent=107 // pred_check_branch
              %361 = sbr.rel (0) target = $region112
            $region111: #{cmsa_apply.4} parent=107 // pred_region
              // Predicated region
              $region124: #{cmsa_apply.4} parent=111 // pred_check
                _
              $region125: #{cmsa_apply.4} parent=111 // pred_check_branch
                %379 = sbr.rel (0) target = $region127
              $region126: #{cmsa_apply.4} parent=111 // pred_region
                loop: start=0, step=1, limit=1
                $region128: #{cmsa_apply.4} parent=126 // loop_pre_header
                  _
                $region129: #{cmsa_apply.4} parent=126 // loop_header
                  %s381 = sphi 0, %s385
                  %p382 = scmp.ge.s32.totalorder %s381, 1
                  %s386 = sphi %s357, %s357
                  %s387 = sphi %s353, %s353
                $region130: #{cmsa_apply.4} parent=126 // loop_header_branch
                  %384 = sbr.rel (%p382) target = $region134
                $region131: #{cmsa_apply.4} parent=126 // loop_body
                  %v388 = vld [vmem:[%s386] sm:$0xff]
                  %389 = vst [vmem:[%s387] sm:$0xff] %v388
                  %v390 = vld [vmem:[%s386 + $0x20] sm:$0xff]
                  %391 = vst [vmem:[%s387 + $0x8] sm:$0xff] %v390
                $region132: #{cmsa_apply.4} parent=126 // loop_footer
                  %s385 = sadd.s32 1, %s381
                $region133: #{cmsa_apply.4} parent=126 // loop_footer_branch
                  %380 = sbr.rel target = $region129
                $region134: #{cmsa_apply.4} parent=126 // loop_exit
                  _
              $region127: #{cmsa_apply.4} parent=111 // pred_fallthru
                _
              // Predicated region
              $region135: #{cmsa_apply.4} parent=111 // pred_check
                _
              $region136: #{cmsa_apply.4} parent=111 // pred_check_branch
                %393 = sbr.rel target = $region138
              $region137: #{cmsa_apply.4} parent=111 // pred_region
                _
              $region138: #{cmsa_apply.4} parent=111 // pred_fallthru
                _
            $region112: #{cmsa_apply.4} parent=107 // pred_fallthru
              _
            // Predicated region
            $region113: #{cmsa_apply.4} parent=107 // pred_check
              _
            $region114: #{cmsa_apply.4} parent=107 // pred_check_branch
              %363 = sbr.rel target = $region116
            $region115: #{cmsa_apply.4} parent=107 // pred_region
              %s365 = ssub.s32 256, 1
              loop: start=0, step=1, limit=1
              $region117: #{cmsa_apply.4} parent=115 // loop_pre_header
                _
              $region118: #{cmsa_apply.4} parent=115 // loop_header
                %s367 = sphi 0, %s371
                %p368 = scmp.ge.s32.totalorder %s367, 1
                %s372 = sphi %s357, %s357
                %s373 = sphi %s353, %s353
              $region119: #{cmsa_apply.4} parent=115 // loop_header_branch
                %370 = sbr.rel (%p368) target = $region123
              $region120: #{cmsa_apply.4} parent=115 // loop_body
                %v374 = vld [vmem:[%s372] sm:%s365]
                %375 = vst [vmem:[%s373] sm:%s365] %v374
                %v376 = vld [vmem:[%s372 + $0x20] sm:%s365]
                %377 = vst [vmem:[%s373 + $0x8] sm:%s365] %v376
              $region121: #{cmsa_apply.4} parent=115 // loop_footer
                %s371 = sadd.s32 1, %s367
              $region122: #{cmsa_apply.4} parent=115 // loop_footer_branch
                %366 = sbr.rel target = $region118
              $region123: #{cmsa_apply.4} parent=115 // loop_exit
                _
            $region116: #{cmsa_apply.4} parent=107 // pred_fallthru
              _
          $region108: #{cmsa_apply.4} parent=103 // pred_fallthru
            _
          %394 = vnop
        $region104: #{cmsa_apply.4} parent=15 // pred_fallthru
          _
        // Predicated region
        $region139: #{cmsa_apply.4} parent=15 // pred_check
          %p395 = pneg %p182
        $region140: #{cmsa_apply.4} parent=15 // pred_check_branch
          %397 = sbr.rel (%p395) target = $region142
        $region141: #{cmsa_apply.4} parent=15 // pred_region
          %s398 = sand.u32 %s172, 1
          %s399 = sand.u32 %s172, 1
          %s400 = smul.addr %s399, 16
          %s401 = scalar_lea.vmem [#allocation5], %s400
          %s402 = smul.addr %s19, 8
          %s403 = sadd.s32 %s20, %s402
          %s404 = smul.addr %s403, 8
          %s405 = scalar_lea.vmem %s5, %s404
          // Predicated region
          $region143: #{cmsa_apply.4} parent=141 // pred_check
            _
          $region144: #{cmsa_apply.4} parent=141 // pred_check_branch
            %407 = sbr.rel (0) target = $region146
          $region145: #{cmsa_apply.4} parent=141 // pred_region
            // Predicated region
            $region147: #{cmsa_apply.4} parent=145 // pred_check
              _
            $region148: #{cmsa_apply.4} parent=145 // pred_check_branch
              %409 = sbr.rel (0) target = $region150
            $region149: #{cmsa_apply.4} parent=145 // pred_region
              // Predicated region
              $region162: #{cmsa_apply.4} parent=149 // pred_check
                _
              $region163: #{cmsa_apply.4} parent=149 // pred_check_branch
                %427 = sbr.rel (0) target = $region165
              $region164: #{cmsa_apply.4} parent=149 // pred_region
                loop: start=0, step=1, limit=1
                $region166: #{cmsa_apply.4} parent=164 // loop_pre_header
                  _
                $region167: #{cmsa_apply.4} parent=164 // loop_header
                  %s429 = sphi 0, %s433
                  %p430 = scmp.ge.s32.totalorder %s429, 1
                  %s434 = sphi %s405, %s405
                  %s435 = sphi %s401, %s401
                $region168: #{cmsa_apply.4} parent=164 // loop_header_branch
                  %432 = sbr.rel (%p430) target = $region172
                $region169: #{cmsa_apply.4} parent=164 // loop_body
                  %v436 = vld [vmem:[%s434] sm:$0xff]
                  %437 = vst [vmem:[%s435] sm:$0xff] %v436
                  %v438 = vld [vmem:[%s434 + $0x20] sm:$0xff]
                  %439 = vst [vmem:[%s435 + $0x8] sm:$0xff] %v438
                $region170: #{cmsa_apply.4} parent=164 // loop_footer
                  %s433 = sadd.s32 1, %s429
                $region171: #{cmsa_apply.4} parent=164 // loop_footer_branch
                  %428 = sbr.rel target = $region167
                $region172: #{cmsa_apply.4} parent=164 // loop_exit
                  _
              $region165: #{cmsa_apply.4} parent=149 // pred_fallthru
                _
              // Predicated region
              $region173: #{cmsa_apply.4} parent=149 // pred_check
                _
              $region174: #{cmsa_apply.4} parent=149 // pred_check_branch
                %441 = sbr.rel target = $region176
              $region175: #{cmsa_apply.4} parent=149 // pred_region
                _
              $region176: #{cmsa_apply.4} parent=149 // pred_fallthru
                _
            $region150: #{cmsa_apply.4} parent=145 // pred_fallthru
              _
            // Predicated region
            $region151: #{cmsa_apply.4} parent=145 // pred_check
              _
            $region152: #{cmsa_apply.4} parent=145 // pred_check_branch
              %411 = sbr.rel target = $region154
            $region153: #{cmsa_apply.4} parent=145 // pred_region
              %s413 = ssub.s32 256, 1
              loop: start=0, step=1, limit=1
              $region155: #{cmsa_apply.4} parent=153 // loop_pre_header
                _
              $region156: #{cmsa_apply.4} parent=153 // loop_header
                %s415 = sphi 0, %s419
                %p416 = scmp.ge.s32.totalorder %s415, 1
                %s420 = sphi %s405, %s405
                %s421 = sphi %s401, %s401
              $region157: #{cmsa_apply.4} parent=153 // loop_header_branch
                %418 = sbr.rel (%p416) target = $region161
              $region158: #{cmsa_apply.4} parent=153 // loop_body
                %v422 = vld [vmem:[%s420] sm:%s413]
                %423 = vst [vmem:[%s421] sm:%s413] %v422
                %v424 = vld [vmem:[%s420 + $0x20] sm:%s413]
                %425 = vst [vmem:[%s421 + $0x8] sm:%s413] %v424
              $region159: #{cmsa_apply.4} parent=153 // loop_footer
                %s419 = sadd.s32 1, %s415
              $region160: #{cmsa_apply.4} parent=153 // loop_footer_branch
                %414 = sbr.rel target = $region156
              $region161: #{cmsa_apply.4} parent=153 // loop_exit
                _
            $region154: #{cmsa_apply.4} parent=145 // pred_fallthru
              _
          $region146: #{cmsa_apply.4} parent=141 // pred_fallthru
            _
          %442 = vnop
        $region142: #{cmsa_apply.4} parent=15 // pred_fallthru
          _
      $region16: #{cmsa_apply.4} parent=5 // pred_fallthru
        _
      %p443 = scmp.le.s32.totalorder 1, %s12
      %p444 = scmp.lt.s32.totalorder %s12, 9
      %p445 = pnand %p443, %p444
      %p446 = pneg %p445
      // Predicated region
      $region177: #{cmsa_apply.4} parent=5 // pred_check
        _
      $region178: #{cmsa_apply.4} parent=5 // pred_check_branch
        %448 = sbr.rel (%p445) target = $region180
      $region179: #{cmsa_apply.4} parent=5 // pred_region
        %s449 = ssub.s32 %s12, 1
        %s450 = sand.u32 %s91, 1
        %s451 = sand.u32 %s91, 1
        %s452 = smul.addr %s451, 16
        %s453 = scalar_lea.vmem [#allocation2], %s452
        // Predicated region
        $region181: #{cmsa_apply.4} parent=179 // pred_check
          %p454 = pneg %p104
        $region182: #{cmsa_apply.4} parent=179 // pred_check_branch
          %456 = sbr.rel (%p454) target = $region184
        $region183: #{cmsa_apply.4} parent=179 // pred_region
          _
        $region184: #{cmsa_apply.4} parent=179 // pred_fallthru
          _
        %s457 = sand.u32 %s119, 1
        %s458 = sand.u32 %s119, 1
        %s459 = smul.addr %s458, 16
        %s460 = scalar_lea.vmem [#allocation3], %s459
        // Predicated region
        $region185: #{cmsa_apply.4} parent=179 // pred_check
          %p461 = pneg %p132
        $region186: #{cmsa_apply.4} parent=179 // pred_check_branch
          %463 = sbr.rel (%p461) target = $region188
        $region187: #{cmsa_apply.4} parent=179 // pred_region
          _
        $region188: #{cmsa_apply.4} parent=179 // pred_fallthru
          _
        %s464 = sand.u32 %s147, 1
        %s465 = sand.u32 %s147, 1
        %s466 = smul.addr %s465, 16
        %s467 = scalar_lea.vmem [#allocation4], %s466
        // Predicated region
        $region189: #{cmsa_apply.4} parent=179 // pred_check
          %p468 = pneg %p160
        $region190: #{cmsa_apply.4} parent=179 // pred_check_branch
          %470 = sbr.rel (%p468) target = $region192
        $region191: #{cmsa_apply.4} parent=179 // pred_region
          _
        $region192: #{cmsa_apply.4} parent=179 // pred_fallthru
          _
        %s471 = sand.u32 %s175, 1
        %s472 = sand.u32 %s175, 1
        %s473 = smul.addr %s472, 16
        %s474 = scalar_lea.vmem [#allocation5], %s473
        // Predicated region
        $region193: #{cmsa_apply.4} parent=179 // pred_check
          %p475 = pneg %p188
        $region194: #{cmsa_apply.4} parent=179 // pred_check_branch
          %477 = sbr.rel (%p475) target = $region196
        $region195: #{cmsa_apply.4} parent=179 // pred_region
          _
        $region196: #{cmsa_apply.4} parent=179 // pred_fallthru
          _
        %p478 = scmp.lt.s32.totalorder %s21, 1
        %s479 = scalar_select %p478, %s21, 1
        %s480 = smul.addr %s479, 8
        %s481 = smul.addr %s480, 8
        %s482 = scalar_lea.vmem %s0, %s481
        %p483 = pneg %p50
        %p484 = pneg %p47
        %p485 = scmp.lt.s32.totalorder %s21, 1
        %s486 = scalar_select %p485, %s21, 1
        %s487 = smul.addr %s486, 2
        %s488 = smul.addr %s487, 8
        %s489 = scalar_lea.vmem %s1, %s488
        %p490 = pneg %p76
        %p491 = pneg %p73
        %s492 = sand.u32 %s91, 1
        %s493 = sand.u32 %s91, 1
        %s494 = smul.addr %s493, 16
        %s495 = scalar_lea.vmem [#allocation2], %s494
        %p496 = pneg %p104
        %p497 = pneg %p101
        %s498 = sand.u32 %s119, 1
        %s499 = sand.u32 %s119, 1
        %s500 = smul.addr %s499, 16
        %s501 = scalar_lea.vmem [#allocation3], %s500
        %p502 = pneg %p132
        %p503 = pneg %p129
        %s504 = sand.u32 %s147, 1
        %s505 = sand.u32 %s147, 1
        %s506 = smul.addr %s505, 16
        %s507 = scalar_lea.vmem [#allocation4], %s506
        %p508 = pneg %p160
        %p509 = pneg %p157
        %s510 = sand.u32 %s175, 1
        %s511 = sand.u32 %s175, 1
        %s512 = smul.addr %s511, 16
        %s513 = scalar_lea.vmem [#allocation5], %s512
        %p514 = pneg %p188
        %p515 = pneg %p185
        %p516 = pneg %p216
        %p517 = pneg %p213
        %s518 = sand.u32 %s203, 1
        %s519 = sand.u32 %s203, 1
        %s520 = smul.addr %s519, 16
        %s521 = scalar_lea.vmem [#allocation6], %s520
        %p522 = scmp.lt.s32.totalorder %s21, 1
        %s523 = scalar_select %p522, %s21, 1
        %s524 = smul.addr %s523, 8
        %s525 = smul.addr %s524, 8
        %s526 = scalar_lea.vmem %s0, %s525
        %p527 = scmp.lt.s32.totalorder %s21, 1
        %s528 = scalar_select %p527, %s21, 1
        %s529 = smul.addr %s528, 2
        %s530 = smul.addr %s529, 8
        %s531 = scalar_lea.vmem %s1, %s530
        %v532 = vld [vmem:[%s526] sm:$0xff]
        %v533 = vld [vmem:[%s526 + $0x8] sm:$0xff]
        %v534 = vld [vmem:[%s453] sm:$0xff]
        %v535 = vld [vmem:[%s453 + $0x8] sm:$0xff]
        %s536 = scalar_lea.vmem %s526, 16
        %v537 = vld [vmem:[%s536] sm:$0xff]
        %v538 = vld [vmem:[%s536 + $0x8] sm:$0xff]
        %v539 = vld [vmem:[%s460] sm:$0xff]
        %v540 = vld [vmem:[%s460 + $0x8] sm:$0xff]
        %vm541 = vcmask 130048
        %v543 = vsel %vm541, %v537, 0
        %v546 = vsel %vm541, %v538, 0
        %548 = vmatpush.msra.mxu0 0.0
        %549 = vmatpush.msra.mxu0 0.0
        %550 = vmatpush.msra.mxu0 0.0
        %551 = vmatpush.msra.mxu0 0.0
        %552 = vmatpush.msra.mxu0 0.0
        %553 = vmatpush.msra.mxu0 0.0
        %554 = vmatpush.msra.mxu0 0.0
        %555 = vmatpush.msra.mxu0 0.0
        %556 = vmatpush.msra.mxu0 0.0
        %557 = vmatpush.msra.mxu0 0.0
        %558 = vmatpush.msra.mxu0 0.0
        %559 = vmatpush.msra.mxu0 0.0
        %560 = vmatpush.msra.mxu0 0.0
        %561 = vmatpush.msra.mxu0 0.0
        %562 = vmatpush.msra.mxu0 %v540
        %563 = vmatpush.msra.mxu0 %v539
        %564 = vmatmul.f32.gmra.mxu0 %v543
        %v565 = vpop.f32.mrf.mxu0
        %v566 = vadd.f32 0.0, %v565
        %567 = vmatmul.f32.gmra.mxu0 %v546
        %v568 = vpop.f32.mrf.mxu0
        %v569 = vadd.f32 0.0, %v568
        %570 = vdwg.mxu0
        %v572 = vsel %vm541, %v532, 0
        %v575 = vsel %vm541, %v533, 0
        %577 = vmatpush.msra.mxu0 0.0
        %578 = vmatpush.msra.mxu0 0.0
        %579 = vmatpush.msra.mxu0 0.0
        %580 = vmatpush.msra.mxu0 0.0
        %581 = vmatpush.msra.mxu0 0.0
        %582 = vmatpush.msra.mxu0 0.0
        %583 = vmatpush.msra.mxu0 0.0
        %584 = vmatpush.msra.mxu0 0.0
        %585 = vmatpush.msra.mxu0 0.0
        %586 = vmatpush.msra.mxu0 0.0
        %587 = vmatpush.msra.mxu0 0.0
        %588 = vmatpush.msra.mxu0 0.0
        %589 = vmatpush.msra.mxu0 0.0
        %590 = vmatpush.msra.mxu0 0.0
        %591 = vmatpush.msra.mxu0 %v535
        %592 = vmatpush.msra.mxu0 %v534
        %593 = vmatmul.f32.gmra.mxu0 %v572
        %v594 = vpop.f32.mrf.mxu0
        %v595 = vadd.f32 %v566, %v594
        %596 = vmatmul.f32.gmra.mxu0 %v575
        %v597 = vpop.f32.mrf.mxu0
        %v598 = vadd.f32 %v569, %v597
        %599 = vdwg.mxu0
        %s600 = scalar_lea.vmem %s526, 32
        %v601 = vld [vmem:[%s600] sm:$0xff]
        %v602 = vld [vmem:[%s600 + $0x8] sm:$0xff]
        %v603 = vld [vmem:[%s467] sm:$0xff]
        %v604 = vld [vmem:[%s467 + $0x8] sm:$0xff]
        %v606 = vsel %vm541, %v601, 0
        %v609 = vsel %vm541, %v602, 0
        %611 = vmatpush.msra.mxu0 0.0
        %612 = vmatpush.msra.mxu0 0.0
        %613 = vmatpush.msra.mxu0 0.0
        %614 = vmatpush.msra.mxu0 0.0
        %615 = vmatpush.msra.mxu0 0.0
        %616 = vmatpush.msra.mxu0 0.0
        %617 = vmatpush.msra.mxu0 0.0
        %618 = vmatpush.msra.mxu0 0.0
        %619 = vmatpush.msra.mxu0 0.0
        %620 = vmatpush.msra.mxu0 0.0
        %621 = vmatpush.msra.mxu0 0.0
        %622 = vmatpush.msra.mxu0 0.0
        %623 = vmatpush.msra.mxu0 0.0
        %624 = vmatpush.msra.mxu0 0.0
        %625 = vmatpush.msra.mxu0 %v604
        %626 = vmatpush.msra.mxu0 %v603
        %627 = vmatmul.f32.gmra.mxu0 %v606
        %v628 = vpop.f32.mrf.mxu0
        %v629 = vadd.f32 0.0, %v628
        %630 = vmatmul.f32.gmra.mxu0 %v609
        %v631 = vpop.f32.mrf.mxu0
        %v632 = vadd.f32 0.0, %v631
        %633 = vdwg.mxu0
        %v634 = vadd.f32 %v595, %v629
        %v635 = vadd.f32 %v598, %v632
        %s636 = scalar_lea.vmem %s526, 48
        %v637 = vld [vmem:[%s636] sm:$0xff]
        %v638 = vld [vmem:[%s636 + $0x8] sm:$0xff]
        %v639 = vld [vmem:[%s474] sm:$0xff]
        %v640 = vld [vmem:[%s474 + $0x8] sm:$0xff]
        %v642 = vsel %vm541, %v637, 0
        %v645 = vsel %vm541, %v638, 0
        %647 = vmatpush.msra.mxu0 0.0
        %648 = vmatpush.msra.mxu0 0.0
        %649 = vmatpush.msra.mxu0 0.0
        %650 = vmatpush.msra.mxu0 0.0
        %651 = vmatpush.msra.mxu0 0.0
        %652 = vmatpush.msra.mxu0 0.0
        %653 = vmatpush.msra.mxu0 0.0
        %654 = vmatpush.msra.mxu0 0.0
        %655 = vmatpush.msra.mxu0 0.0
        %656 = vmatpush.msra.mxu0 0.0
        %657 = vmatpush.msra.mxu0 0.0
        %658 = vmatpush.msra.mxu0 0.0
        %659 = vmatpush.msra.mxu0 0.0
        %660 = vmatpush.msra.mxu0 0.0
        %661 = vmatpush.msra.mxu0 %v640
        %662 = vmatpush.msra.mxu0 %v639
        %663 = vmatmul.f32.gmra.mxu0 %v642
        %v664 = vpop.f32.mrf.mxu0
        %v665 = vadd.f32 0.0, %v664
        %666 = vmatmul.f32.gmra.mxu0 %v645
        %v667 = vpop.f32.mrf.mxu0
        %v668 = vadd.f32 0.0, %v667
        %669 = vdwg.mxu0
        %v670 = vadd.f32 %v634, %v665
        %v671 = vadd.f32 %v635, %v668
        %v672 = vld [vmem:[%s531] sm:$0xff]
        %v673 = vld [vmem:[%s531 + $0x8] sm:$0xff]
        %675 = vset.pattern.permute.xlu0 0
        %676 = vperm.xlu0 %675, %v672
        %v677 = vpop.permute.xlu0 %676
        %680 = vset.pattern.permute.xlu0 0
        %681 = vperm.xlu0 %680, %v673
        %v682 = vpop.permute.xlu0 %681
        %v684 = vadd.f32 %v670, %v677
        %v685 = vadd.f32 %v671, %v682
        %686 = vst [vmem:[%s521] sm:$0xff] %v684
        %687 = vst [vmem:[%s521 + $0x8] sm:$0xff] %v685
        %s688 = sand.u32 %s203, 1
        %s689 = sand.u32 %s203, 1
        %s690 = smul.addr %s689, 16
        %s691 = scalar_lea.vmem [#allocation6], %s690
        // Predicated region
        $region197: #{cmsa_apply.4} parent=179 // pred_check
          %p692 = pneg %p213
        $region198: #{cmsa_apply.4} parent=179 // pred_check_branch
          %694 = sbr.rel (%p692) target = $region200
        $region199: #{cmsa_apply.4} parent=179 // pred_region
          %s695 = smul.addr %s21, 8
          %s696 = sadd.s32 %s22, %s695
          %s697 = smul.addr %s696, 8
          %s698 = scalar_lea.vmem %s6, %s697
          // Predicated region
          $region201: #{cmsa_apply.4} parent=199 // pred_check
            _
          $region202: #{cmsa_apply.4} parent=199 // pred_check_branch
            %700 = sbr.rel (0) target = $region204
          $region203: #{cmsa_apply.4} parent=199 // pred_region
            // Predicated region
            $region205: #{cmsa_apply.4} parent=203 // pred_check
              _
            $region206: #{cmsa_apply.4} parent=203 // pred_check_branch
              %702 = sbr.rel (0) target = $region208
            $region207: #{cmsa_apply.4} parent=203 // pred_region
              // Predicated region
              $region220: #{cmsa_apply.4} parent=207 // pred_check
                _
              $region221: #{cmsa_apply.4} parent=207 // pred_check_branch
                %720 = sbr.rel (0) target = $region223
              $region222: #{cmsa_apply.4} parent=207 // pred_region
                loop: start=0, step=1, limit=1
                $region224: #{cmsa_apply.4} parent=222 // loop_pre_header
                  _
                $region225: #{cmsa_apply.4} parent=222 // loop_header
                  %s722 = sphi 0, %s726
                  %p723 = scmp.ge.s32.totalorder %s722, 1
                  %s727 = sphi %s691, %s691
                  %s728 = sphi %s698, %s698
                $region226: #{cmsa_apply.4} parent=222 // loop_header_branch
                  %725 = sbr.rel (%p723) target = $region230
                $region227: #{cmsa_apply.4} parent=222 // loop_body
                  %v729 = vld [vmem:[%s727] sm:$0xff]
                  %730 = vst [vmem:[%s728] sm:$0xff] %v729
                  %v731 = vld [vmem:[%s727 + $0x8] sm:$0xff]
                  %732 = vst [vmem:[%s728 + $0x20] sm:$0xff] %v731
                $region228: #{cmsa_apply.4} parent=222 // loop_footer
                  %s726 = sadd.s32 1, %s722
                $region229: #{cmsa_apply.4} parent=222 // loop_footer_branch
                  %721 = sbr.rel target = $region225
                $region230: #{cmsa_apply.4} parent=222 // loop_exit
                  _
              $region223: #{cmsa_apply.4} parent=207 // pred_fallthru
                _
              // Predicated region
              $region231: #{cmsa_apply.4} parent=207 // pred_check
                _
              $region232: #{cmsa_apply.4} parent=207 // pred_check_branch
                %734 = sbr.rel target = $region234
              $region233: #{cmsa_apply.4} parent=207 // pred_region
                _
              $region234: #{cmsa_apply.4} parent=207 // pred_fallthru
                _
            $region208: #{cmsa_apply.4} parent=203 // pred_fallthru
              _
            // Predicated region
            $region209: #{cmsa_apply.4} parent=203 // pred_check
              _
            $region210: #{cmsa_apply.4} parent=203 // pred_check_branch
              %704 = sbr.rel target = $region212
            $region211: #{cmsa_apply.4} parent=203 // pred_region
              %s706 = ssub.s32 256, 1
              loop: start=0, step=1, limit=1
              $region213: #{cmsa_apply.4} parent=211 // loop_pre_header
                _
              $region214: #{cmsa_apply.4} parent=211 // loop_header
                %s708 = sphi 0, %s712
                %p709 = scmp.ge.s32.totalorder %s708, 1
                %s713 = sphi %s691, %s691
                %s714 = sphi %s698, %s698
              $region215: #{cmsa_apply.4} parent=211 // loop_header_branch
                %711 = sbr.rel (%p709) target = $region219
              $region216: #{cmsa_apply.4} parent=211 // loop_body
                %v715 = vld [vmem:[%s713] sm:%s706]
                %716 = vst [vmem:[%s714] sm:%s706] %v715
                %v717 = vld [vmem:[%s713 + $0x8] sm:%s706]
                %718 = vst [vmem:[%s714 + $0x20] sm:%s706] %v717
              $region217: #{cmsa_apply.4} parent=211 // loop_footer
                %s712 = sadd.s32 1, %s708
              $region218: #{cmsa_apply.4} parent=211 // loop_footer_branch
                %707 = sbr.rel target = $region214
              $region219: #{cmsa_apply.4} parent=211 // loop_exit
                _
            $region212: #{cmsa_apply.4} parent=203 // pred_fallthru
              _
          $region204: #{cmsa_apply.4} parent=199 // pred_fallthru
            _
          %735 = vnop
        $region200: #{cmsa_apply.4} parent=179 // pred_fallthru
          _
      $region180: #{cmsa_apply.4} parent=5 // pred_fallthru
        _
      %p736 = scmp.le.s32.totalorder 2, %s12
      // Predicated region
      $region235: #{cmsa_apply.4} parent=5 // pred_check
        %p737 = pneg %p736
      $region236: #{cmsa_apply.4} parent=5 // pred_check_branch
        %739 = sbr.rel (%p737) target = $region238
      $region237: #{cmsa_apply.4} parent=5 // pred_region
        %s740 = ssub.s32 %s12, 2
        // Predicated region
        $region239: #{cmsa_apply.4} parent=237 // pred_check
          %p741 = pneg %p219
        $region240: #{cmsa_apply.4} parent=237 // pred_check_branch
          %743 = sbr.rel (%p741) target = $region242
        $region241: #{cmsa_apply.4} parent=237 // pred_region
          %s744 = sand.u32 %s204, 1
          %s745 = sand.u32 %s204, 1
          %s746 = smul.addr %s745, 16
          %s747 = scalar_lea.vmem [#allocation6], %s746
        $region242: #{cmsa_apply.4} parent=237 // pred_fallthru
          _
      $region238: #{cmsa_apply.4} parent=5 // pred_fallthru
        _
    $region6: #{cmsa_apply.4} parent=1 // loop_footer
      %s16 = sadd.s32 1, %s12
    $region7: #{cmsa_apply.4} parent=1 // loop_footer_branch
      %11 = sbr.rel target = $region3
    $region8: #{cmsa_apply.4} parent=1 // loop_exit
      _

</llo_original>
